<compile_context>
chip_gen: v7x
topology: tpu7x:2x2x1
jax: 0.10.0
libtpu: 0.0.40
codegen_flags: <defaults>
</compile_context>

<pallas_src>
import functools

import jax
import jax.numpy as jnp
from jax.experimental import pallas as pl
from jax.experimental.pallas import tpu as pltpu

EPS = 1e-5
# Layer sizes from the PyTorch module: 10 -> 32 -> 64 -> 64 -> 64 -> 1
DIMS = [10, 32, 64, 64, 64, 1]
N_LAYERS = len(DIMS) - 1
MAX_F = max(DIMS[1:])            # row padding for the packed (bias,gamma,beta) buffer
DEFAULT_BATCH_TILE = 1024        # rows per grid step (lanes); multiple of 128
MM_DTYPE = jnp.bfloat16          # MXU operand dtype (accumulation stays f32)


def _round_up(x, m):
    return (x + m - 1) // m * m


def mlp_kernel(x_ref, w0_ref, w1_ref, w2_ref, w3_ref, w4_ref, p_ref, out_ref):
    """One batch tile.  Layout: features on sublanes, batch on lanes.

    x_ref  : (10, T)   f32   transposed input tile
    wN_ref : (F_out, F_in) bf16  weights in PyTorch (out, in) layout
    p_ref  : (MAX_F, 3*N_LAYERS) f32  packed [bias | gamma | beta] columns
    out_ref: (1, T)    f32   lane-dense output row
    """
    w_refs = (w0_ref, w1_ref, w2_ref, w3_ref, w4_ref)
    p = p_ref[...]                     # (64, 15) f32, loaded once per step
    h = x_ref[...]                     # (10, T) f32

    for l in range(N_LAYERS):          # unrolled at trace time (5 layers)
        f_out = DIMS[l + 1]
        inv_f = 1.0 / f_out
        bias = p[:f_out, 3 * l + 0: 3 * l + 1]      # (f_out, 1)
        gamma = p[:f_out, 3 * l + 1: 3 * l + 2]
        beta = p[:f_out, 3 * l + 2: 3 * l + 3]

        # Linear on the MXU: (F_out, F_in) @ (F_in, T), bf16 in / f32 out.
        h = jnp.dot(w_refs[l][...], h.astype(MM_DTYPE),
                    preferred_element_type=jnp.float32) + bias

        # LayerNorm over features (sublane axis), single-pass two-moment form.
        mean = jnp.sum(h, axis=0, keepdims=True) * inv_f          # (1, T)
        ex2 = jnp.sum(h * h, axis=0, keepdims=True) * inv_f       # (1, T)
        var = jnp.maximum(ex2 - mean * mean, 0.0)
        h = (h - mean) * jax.lax.rsqrt(var + EPS) * gamma + beta

        # ReLU
        h = jnp.maximum(h, 0.0)

    out_ref[...] = h.astype(out_ref.dtype)     # (1, T) lane-dense store


@functools.partial(jax.jit, static_argnames=("batch_tile",))
def mlp_forward(x, params, batch_tile=DEFAULT_BATCH_TILE):
    """x: (B, 10) float32.  params: list of 5 tuples (W, b, gamma, beta) with
    W in PyTorch (out_features, in_features) layout.  Returns (B, 1) float32."""
    B, f_in = x.shape
    assert f_in == DIMS[0]

    # Adaptive tile: large batches use `batch_tile`; small batches pad to 128 lanes.
    tile = min(batch_tile, _round_up(B, 128))
    b_pad = _round_up(B, tile)

    # Lane-dense transposed + padded input: (10, B_pad).
    xt = jnp.zeros((DIMS[0], b_pad), jnp.float32).at[:, :B].set(
        x.astype(jnp.float32).T)

    # Weights stay in PyTorch (out, in) layout; cast once to bf16 for the MXU.
    ws = [w.astype(MM_DTYPE) for (w, _, _, _) in params]

    # Pack all 15 small vectors into a single (MAX_F, 15) buffer:
    #   column 3l -> bias_l, 3l+1 -> gamma_l, 3l+2 -> beta_l  (rows >= F_out are 0).
    packed = jnp.zeros((MAX_F, 3 * N_LAYERS), jnp.float32)
    for l, (_, b, g, be) in enumerate(params):
        f_out = DIMS[l + 1]
        packed = packed.at[:f_out, 3 * l + 0].set(b.astype(jnp.float32))
        packed = packed.at[:f_out, 3 * l + 1].set(g.astype(jnp.float32))
        packed = packed.at[:f_out, 3 * l + 2].set(be.astype(jnp.float32))

    in_specs = [pl.BlockSpec((DIMS[0], tile), lambda i: (0, i))]
    for w in ws:
        in_specs.append(pl.BlockSpec(w.shape, lambda i: (0, 0)))
    in_specs.append(pl.BlockSpec(packed.shape, lambda i: (0, 0)))
    out_spec = pl.BlockSpec((1, tile), lambda i: (0, i))

    out_t = pl.pallas_call(
        mlp_kernel,
        out_shape=jax.ShapeDtypeStruct((1, b_pad), jnp.float32),
        grid_spec=pltpu.PrefetchScalarGridSpec(
            num_scalar_prefetch=0,
            grid=(b_pad // tile,),
            in_specs=in_specs,
            out_specs=out_spec,
        ),
        compiler_params=pltpu.CompilerParams(
            dimension_semantics=("parallel",),
        ),
    )(xt, *ws, packed)

    # Layout plumbing back to the PyTorch-shaped (B, 1) output.
    return out_t[0, :B].reshape(B, 1)


def init_params(key):
    """Parameter shapes mirror the PyTorch module (W stored as (out, in)).

    gamma/beta are randomized (instead of the 1/0 defaults) so the self-test
    exercises the full affine LayerNorm path deterministically."""
    params = []
    for layer in range(N_LAYERS):
        fan_in, fan_out = DIMS[layer], DIMS[layer + 1]
        key, kw, kb, kg, kbe = jax.random.split(key, 5)
        bound = 1.0 / jnp.sqrt(fan_in)
        w = jax.random.uniform(kw, (fan_out, fan_in), jnp.float32, -bound, bound)
        b = jax.random.uniform(kb, (fan_out,), jnp.float32, -bound, bound)
        gamma = 1.0 + 0.1 * jax.random.uniform(kg, (fan_out,), jnp.float32, -1.0, 1.0)
        beta = 0.1 * jax.random.uniform(kbe, (fan_out,), jnp.float32, -1.0, 1.0)
        params.append((w, b, gamma, beta))
    return params


def mlp_reference(x, params):
    """Pure-JAX reference with exact PyTorch semantics (two-pass LayerNorm, f32)."""
    h = x.astype(jnp.float32)
    for (w, b, g, be) in params:
        h = h @ w.T + b
        mean = jnp.mean(h, axis=-1, keepdims=True)
        var = jnp.mean((h - mean) ** 2, axis=-1, keepdims=True)
        h = (h - mean) * jax.lax.rsqrt(var + EPS) * g + be
        h = jnp.maximum(h, 0.0)
    return h


if __name__ == "__main__":
    key = jax.random.PRNGKey(0)
    key, kx = jax.random.split(key)
    B = 16
    x = jax.random.normal(kx, (B, DIMS[0]), jnp.float32)
    params = init_params(key)

    out = jax.block_until_ready(mlp_forward(x, params))
    ref = mlp_reference(x, params)

    assert out.shape == (B, 1), out.shape
    # Final layer is LayerNorm(1)+ReLU, so the output is exactly relu(beta_last)
    # per row in both implementations; tolerance check is still kept.
    if not jnp.allclose(out, ref, atol=1e-5, rtol=1e-5):
        raise AssertionError("Pallas MLP output mismatch vs JAX reference")

    print("KERNEL_OK")
</pallas_src>

<mosaic_0001>
module attributes {stable_mosaic.version = 11 : i64} {
  func.func @mlp_kernel(%arg0: i32, %arg1: memref<10x128xf32, #tpu.memory_space<vmem>>, %arg2: memref<32x10xbf16, #tpu.memory_space<vmem>>, %arg3: memref<64x32xbf16, #tpu.memory_space<vmem>>, %arg4: memref<64x64xbf16, #tpu.memory_space<vmem>>, %arg5: memref<64x64xbf16, #tpu.memory_space<vmem>>, %arg6: memref<1x64xbf16, #tpu.memory_space<vmem>>, %arg7: memref<64x15xf32, #tpu.memory_space<vmem>>, %arg8: memref<1x128xf32, #tpu.memory_space<vmem>>) attributes {dimension_semantics = [#tpu.dimension_semantics<parallel>], iteration_bounds = array<i64: 1>, scalar_prefetch = 0 : i64, scratch_operands = 0 : i64, tpu.core_type = #tpu.core_type<tc>, window_params = [{transform_indices = @transform_0, window_bounds = array<i64: 10, 128>}, {pipeline_mode = #tpu.pipeline_mode<synchronous>, transform_indices = @transform_1, window_bounds = array<i64: 32, 10>}, {pipeline_mode = #tpu.pipeline_mode<synchronous>, transform_indices = @transform_2, window_bounds = array<i64: 64, 32>}, {pipeline_mode = #tpu.pipeline_mode<synchronous>, transform_indices = @transform_3, window_bounds = array<i64: 64, 64>}, {pipeline_mode = #tpu.pipeline_mode<synchronous>, transform_indices = @transform_4, window_bounds = array<i64: 64, 64>}, {pipeline_mode = #tpu.pipeline_mode<synchronous>, transform_indices = @transform_5, window_bounds = array<i64: 1, 64>}, {pipeline_mode = #tpu.pipeline_mode<synchronous>, transform_indices = @transform_6, window_bounds = array<i64: 64, 15>}, {transform_indices = @transform_7, window_bounds = array<i64: 1, 128>}]} {
    %c0 = arith.constant 0 : index
    %c0_0 = arith.constant 0 : index
    %0 = vector.load %arg7[%c0, %c0_0] : memref<64x15xf32, #tpu.memory_space<vmem>>, vector<64x15xf32>
    %c0_1 = arith.constant 0 : index
    %c0_2 = arith.constant 0 : index
    %1 = vector.load %arg1[%c0_1, %c0_2] : memref<10x128xf32, #tpu.memory_space<vmem>>, vector<10x128xf32>
    %2 = vector.extract_strided_slice %0 {offsets = [0, 0], sizes = [32, 1], strides = [1, 1]} : vector<64x15xf32> to vector<32x1xf32>
    %3 = vector.extract_strided_slice %0 {offsets = [0, 1], sizes = [32, 1], strides = [1, 1]} : vector<64x15xf32> to vector<32x1xf32>
    %4 = vector.extract_strided_slice %0 {offsets = [0, 2], sizes = [32, 1], strides = [1, 1]} : vector<64x15xf32> to vector<32x1xf32>
    %c0_3 = arith.constant 0 : index
    %c0_4 = arith.constant 0 : index
    %5 = vector.load %arg2[%c0_3, %c0_4] : memref<32x10xbf16, #tpu.memory_space<vmem>>, vector<32x10xbf16>
    %6 = arith.truncf %1 : vector<10x128xf32> to vector<10x128xbf16>
    %cst = arith.constant dense<0.000000e+00> : vector<32x128xf32>
    %7 = tpu.matmul %5, %6, %cst {dimension_numbers = #tpu.dot_dimension_numbers<[1], [0], [0], [1], [0, 0, 1, 1], [], []>} : vector<32x10xbf16>, vector<10x128xbf16>, vector<32x128xf32> -> vector<32x128xf32>
    %8 = vector.broadcast %2 : vector<32x1xf32> to vector<32x128xf32>
    %9 = arith.addf %7, %8 : vector<32x128xf32>
    %cst_5 = arith.constant dense<0.000000e+00> : vector<128xf32>
    %10 = vector.multi_reduction <add>, %9, %cst_5 [0] : vector<32x128xf32> to vector<128xf32>
    %11 = vector.shape_cast %10 : vector<128xf32> to vector<1x128xf32>
    %cst_6 = arith.constant 3.125000e-02 : f32
    %12 = vector.broadcast %cst_6 : f32 to vector<1x128xf32>
    %13 = arith.mulf %11, %12 : vector<1x128xf32>
    %14 = arith.mulf %9, %9 : vector<32x128xf32>
    %cst_7 = arith.constant dense<0.000000e+00> : vector<128xf32>
    %15 = vector.multi_reduction <add>, %14, %cst_7 [0] : vector<32x128xf32> to vector<128xf32>
    %16 = vector.shape_cast %15 : vector<128xf32> to vector<1x128xf32>
    %cst_8 = arith.constant 3.125000e-02 : f32
    %17 = vector.broadcast %cst_8 : f32 to vector<1x128xf32>
    %18 = arith.mulf %16, %17 : vector<1x128xf32>
    %19 = arith.mulf %13, %13 : vector<1x128xf32>
    %20 = arith.subf %18, %19 : vector<1x128xf32>
    %cst_9 = arith.constant 0.000000e+00 : f32
    %21 = vector.broadcast %cst_9 : f32 to vector<1x128xf32>
    %22 = arith.maximumf %20, %21 : vector<1x128xf32>
    %23 = vector.broadcast %13 : vector<1x128xf32> to vector<32x128xf32>
    %24 = arith.subf %9, %23 : vector<32x128xf32>
    %cst_10 = arith.constant 9.99999974E-6 : f32
    %25 = vector.broadcast %cst_10 : f32 to vector<1x128xf32>
    %26 = arith.addf %22, %25 : vector<1x128xf32>
    %27 = math.rsqrt %26 : vector<1x128xf32>
    %28 = vector.broadcast %27 : vector<1x128xf32> to vector<32x128xf32>
    %29 = arith.mulf %24, %28 : vector<32x128xf32>
    %30 = vector.broadcast %3 : vector<32x1xf32> to vector<32x128xf32>
    %31 = arith.mulf %29, %30 : vector<32x128xf32>
    %32 = vector.broadcast %4 : vector<32x1xf32> to vector<32x128xf32>
    %33 = arith.addf %31, %32 : vector<32x128xf32>
    %cst_11 = arith.constant 0.000000e+00 : f32
    %34 = vector.broadcast %cst_11 : f32 to vector<32x128xf32>
    %35 = arith.maximumf %33, %34 : vector<32x128xf32>
    %36 = vector.extract_strided_slice %0 {offsets = [0, 3], sizes = [64, 1], strides = [1, 1]} : vector<64x15xf32> to vector<64x1xf32>
    %37 = vector.extract_strided_slice %0 {offsets = [0, 4], sizes = [64, 1], strides = [1, 1]} : vector<64x15xf32> to vector<64x1xf32>
    %38 = vector.extract_strided_slice %0 {offsets = [0, 5], sizes = [64, 1], strides = [1, 1]} : vector<64x15xf32> to vector<64x1xf32>
    %c0_12 = arith.constant 0 : index
    %c0_13 = arith.constant 0 : index
    %39 = vector.load %arg3[%c0_12, %c0_13] : memref<64x32xbf16, #tpu.memory_space<vmem>>, vector<64x32xbf16>
    %40 = arith.truncf %35 : vector<32x128xf32> to vector<32x128xbf16>
    %cst_14 = arith.constant dense<0.000000e+00> : vector<64x128xf32>
    %41 = tpu.matmul %39, %40, %cst_14 {dimension_numbers = #tpu.dot_dimension_numbers<[1], [0], [0], [1], [0, 0, 1, 1], [], []>} : vector<64x32xbf16>, vector<32x128xbf16>, vector<64x128xf32> -> vector<64x128xf32>
    %42 = vector.broadcast %36 : vector<64x1xf32> to vector<64x128xf32>
    %43 = arith.addf %41, %42 : vector<64x128xf32>
    %cst_15 = arith.constant dense<0.000000e+00> : vector<128xf32>
    %44 = vector.multi_reduction <add>, %43, %cst_15 [0] : vector<64x128xf32> to vector<128xf32>
    %45 = vector.shape_cast %44 : vector<128xf32> to vector<1x128xf32>
    %cst_16 = arith.constant 1.562500e-02 : f32
    %46 = vector.broadcast %cst_16 : f32 to vector<1x128xf32>
    %47 = arith.mulf %45, %46 : vector<1x128xf32>
    %48 = arith.mulf %43, %43 : vector<64x128xf32>
    %cst_17 = arith.constant dense<0.000000e+00> : vector<128xf32>
    %49 = vector.multi_reduction <add>, %48, %cst_17 [0] : vector<64x128xf32> to vector<128xf32>
    %50 = vector.shape_cast %49 : vector<128xf32> to vector<1x128xf32>
    %cst_18 = arith.constant 1.562500e-02 : f32
    %51 = vector.broadcast %cst_18 : f32 to vector<1x128xf32>
    %52 = arith.mulf %50, %51 : vector<1x128xf32>
    %53 = arith.mulf %47, %47 : vector<1x128xf32>
    %54 = arith.subf %52, %53 : vector<1x128xf32>
    %cst_19 = arith.constant 0.000000e+00 : f32
    %55 = vector.broadcast %cst_19 : f32 to vector<1x128xf32>
    %56 = arith.maximumf %54, %55 : vector<1x128xf32>
    %57 = vector.broadcast %47 : vector<1x128xf32> to vector<64x128xf32>
    %58 = arith.subf %43, %57 : vector<64x128xf32>
    %cst_20 = arith.constant 9.99999974E-6 : f32
    %59 = vector.broadcast %cst_20 : f32 to vector<1x128xf32>
    %60 = arith.addf %56, %59 : vector<1x128xf32>
    %61 = math.rsqrt %60 : vector<1x128xf32>
    %62 = vector.broadcast %61 : vector<1x128xf32> to vector<64x128xf32>
    %63 = arith.mulf %58, %62 : vector<64x128xf32>
    %64 = vector.broadcast %37 : vector<64x1xf32> to vector<64x128xf32>
    %65 = arith.mulf %63, %64 : vector<64x128xf32>
    %66 = vector.broadcast %38 : vector<64x1xf32> to vector<64x128xf32>
    %67 = arith.addf %65, %66 : vector<64x128xf32>
    %cst_21 = arith.constant 0.000000e+00 : f32
    %68 = vector.broadcast %cst_21 : f32 to vector<64x128xf32>
    %69 = arith.maximumf %67, %68 : vector<64x128xf32>
    %70 = vector.extract_strided_slice %0 {offsets = [0, 6], sizes = [64, 1], strides = [1, 1]} : vector<64x15xf32> to vector<64x1xf32>
    %71 = vector.extract_strided_slice %0 {offsets = [0, 7], sizes = [64, 1], strides = [1, 1]} : vector<64x15xf32> to vector<64x1xf32>
    %72 = vector.extract_strided_slice %0 {offsets = [0, 8], sizes = [64, 1], strides = [1, 1]} : vector<64x15xf32> to vector<64x1xf32>
    %c0_22 = arith.constant 0 : index
    %c0_23 = arith.constant 0 : index
    %73 = vector.load %arg4[%c0_22, %c0_23] : memref<64x64xbf16, #tpu.memory_space<vmem>>, vector<64x64xbf16>
    %74 = arith.truncf %69 : vector<64x128xf32> to vector<64x128xbf16>
    %cst_24 = arith.constant dense<0.000000e+00> : vector<64x128xf32>
    %75 = tpu.matmul %73, %74, %cst_24 {dimension_numbers = #tpu.dot_dimension_numbers<[1], [0], [0], [1], [0, 0, 1, 1], [], []>} : vector<64x64xbf16>, vector<64x128xbf16>, vector<64x128xf32> -> vector<64x128xf32>
    %76 = vector.broadcast %70 : vector<64x1xf32> to vector<64x128xf32>
    %77 = arith.addf %75, %76 : vector<64x128xf32>
    %cst_25 = arith.constant dense<0.000000e+00> : vector<128xf32>
    %78 = vector.multi_reduction <add>, %77, %cst_25 [0] : vector<64x128xf32> to vector<128xf32>
    %79 = vector.shape_cast %78 : vector<128xf32> to vector<1x128xf32>
    %cst_26 = arith.constant 1.562500e-02 : f32
    %80 = vector.broadcast %cst_26 : f32 to vector<1x128xf32>
    %81 = arith.mulf %79, %80 : vector<1x128xf32>
    %82 = arith.mulf %77, %77 : vector<64x128xf32>
    %cst_27 = arith.constant dense<0.000000e+00> : vector<128xf32>
    %83 = vector.multi_reduction <add>, %82, %cst_27 [0] : vector<64x128xf32> to vector<128xf32>
    %84 = vector.shape_cast %83 : vector<128xf32> to vector<1x128xf32>
    %cst_28 = arith.constant 1.562500e-02 : f32
    %85 = vector.broadcast %cst_28 : f32 to vector<1x128xf32>
    %86 = arith.mulf %84, %85 : vector<1x128xf32>
    %87 = arith.mulf %81, %81 : vector<1x128xf32>
    %88 = arith.subf %86, %87 : vector<1x128xf32>
    %cst_29 = arith.constant 0.000000e+00 : f32
    %89 = vector.broadcast %cst_29 : f32 to vector<1x128xf32>
    %90 = arith.maximumf %88, %89 : vector<1x128xf32>
    %91 = vector.broadcast %81 : vector<1x128xf32> to vector<64x128xf32>
    %92 = arith.subf %77, %91 : vector<64x128xf32>
    %cst_30 = arith.constant 9.99999974E-6 : f32
    %93 = vector.broadcast %cst_30 : f32 to vector<1x128xf32>
    %94 = arith.addf %90, %93 : vector<1x128xf32>
    %95 = math.rsqrt %94 : vector<1x128xf32>
    %96 = vector.broadcast %95 : vector<1x128xf32> to vector<64x128xf32>
    %97 = arith.mulf %92, %96 : vector<64x128xf32>
    %98 = vector.broadcast %71 : vector<64x1xf32> to vector<64x128xf32>
    %99 = arith.mulf %97, %98 : vector<64x128xf32>
    %100 = vector.broadcast %72 : vector<64x1xf32> to vector<64x128xf32>
    %101 = arith.addf %99, %100 : vector<64x128xf32>
    %cst_31 = arith.constant 0.000000e+00 : f32
    %102 = vector.broadcast %cst_31 : f32 to vector<64x128xf32>
    %103 = arith.maximumf %101, %102 : vector<64x128xf32>
    %104 = vector.extract_strided_slice %0 {offsets = [0, 9], sizes = [64, 1], strides = [1, 1]} : vector<64x15xf32> to vector<64x1xf32>
    %105 = vector.extract_strided_slice %0 {offsets = [0, 10], sizes = [64, 1], strides = [1, 1]} : vector<64x15xf32> to vector<64x1xf32>
    %106 = vector.extract_strided_slice %0 {offsets = [0, 11], sizes = [64, 1], strides = [1, 1]} : vector<64x15xf32> to vector<64x1xf32>
    %c0_32 = arith.constant 0 : index
    %c0_33 = arith.constant 0 : index
    %107 = vector.load %arg5[%c0_32, %c0_33] : memref<64x64xbf16, #tpu.memory_space<vmem>>, vector<64x64xbf16>
    %108 = arith.truncf %103 : vector<64x128xf32> to vector<64x128xbf16>
    %cst_34 = arith.constant dense<0.000000e+00> : vector<64x128xf32>
    %109 = tpu.matmul %107, %108, %cst_34 {dimension_numbers = #tpu.dot_dimension_numbers<[1], [0], [0], [1], [0, 0, 1, 1], [], []>} : vector<64x64xbf16>, vector<64x128xbf16>, vector<64x128xf32> -> vector<64x128xf32>
    %110 = vector.broadcast %104 : vector<64x1xf32> to vector<64x128xf32>
    %111 = arith.addf %109, %110 : vector<64x128xf32>
    %cst_35 = arith.constant dense<0.000000e+00> : vector<128xf32>
    %112 = vector.multi_reduction <add>, %111, %cst_35 [0] : vector<64x128xf32> to vector<128xf32>
    %113 = vector.shape_cast %112 : vector<128xf32> to vector<1x128xf32>
    %cst_36 = arith.constant 1.562500e-02 : f32
    %114 = vector.broadcast %cst_36 : f32 to vector<1x128xf32>
    %115 = arith.mulf %113, %114 : vector<1x128xf32>
    %116 = arith.mulf %111, %111 : vector<64x128xf32>
    %cst_37 = arith.constant dense<0.000000e+00> : vector<128xf32>
    %117 = vector.multi_reduction <add>, %116, %cst_37 [0] : vector<64x128xf32> to vector<128xf32>
    %118 = vector.shape_cast %117 : vector<128xf32> to vector<1x128xf32>
    %cst_38 = arith.constant 1.562500e-02 : f32
    %119 = vector.broadcast %cst_38 : f32 to vector<1x128xf32>
    %120 = arith.mulf %118, %119 : vector<1x128xf32>
    %121 = arith.mulf %115, %115 : vector<1x128xf32>
    %122 = arith.subf %120, %121 : vector<1x128xf32>
    %cst_39 = arith.constant 0.000000e+00 : f32
    %123 = vector.broadcast %cst_39 : f32 to vector<1x128xf32>
    %124 = arith.maximumf %122, %123 : vector<1x128xf32>
    %125 = vector.broadcast %115 : vector<1x128xf32> to vector<64x128xf32>
    %126 = arith.subf %111, %125 : vector<64x128xf32>
    %cst_40 = arith.constant 9.99999974E-6 : f32
    %127 = vector.broadcast %cst_40 : f32 to vector<1x128xf32>
    %128 = arith.addf %124, %127 : vector<1x128xf32>
    %129 = math.rsqrt %128 : vector<1x128xf32>
    %130 = vector.broadcast %129 : vector<1x128xf32> to vector<64x128xf32>
    %131 = arith.mulf %126, %130 : vector<64x128xf32>
    %132 = vector.broadcast %105 : vector<64x1xf32> to vector<64x128xf32>
    %133 = arith.mulf %131, %132 : vector<64x128xf32>
    %134 = vector.broadcast %106 : vector<64x1xf32> to vector<64x128xf32>
    %135 = arith.addf %133, %134 : vector<64x128xf32>
    %cst_41 = arith.constant 0.000000e+00 : f32
    %136 = vector.broadcast %cst_41 : f32 to vector<64x128xf32>
    %137 = arith.maximumf %135, %136 : vector<64x128xf32>
    %138 = vector.extract_strided_slice %0 {offsets = [0, 12], sizes = [1, 1], strides = [1, 1]} : vector<64x15xf32> to vector<1x1xf32>
    %139 = vector.extract_strided_slice %0 {offsets = [0, 13], sizes = [1, 1], strides = [1, 1]} : vector<64x15xf32> to vector<1x1xf32>
    %140 = vector.extract_strided_slice %0 {offsets = [0, 14], sizes = [1, 1], strides = [1, 1]} : vector<64x15xf32> to vector<1x1xf32>
    %c0_42 = arith.constant 0 : index
    %c0_43 = arith.constant 0 : index
    %141 = vector.load %arg6[%c0_42, %c0_43] : memref<1x64xbf16, #tpu.memory_space<vmem>>, vector<1x64xbf16>
    %142 = arith.truncf %137 : vector<64x128xf32> to vector<64x128xbf16>
    %cst_44 = arith.constant dense<0.000000e+00> : vector<1x128xf32>
    %143 = tpu.matmul %141, %142, %cst_44 {dimension_numbers = #tpu.dot_dimension_numbers<[1], [0], [0], [1], [0, 0, 1, 1], [], []>} : vector<1x64xbf16>, vector<64x128xbf16>, vector<1x128xf32> -> vector<1x128xf32>
    %144 = vector.broadcast %138 : vector<1x1xf32> to vector<1x128xf32>
    %145 = arith.addf %143, %144 : vector<1x128xf32>
    %cst_45 = arith.constant dense<0.000000e+00> : vector<128xf32>
    %146 = vector.multi_reduction <add>, %145, %cst_45 [0] : vector<1x128xf32> to vector<128xf32>
    %147 = vector.shape_cast %146 : vector<128xf32> to vector<1x128xf32>
    %cst_46 = arith.constant 1.000000e+00 : f32
    %148 = vector.broadcast %cst_46 : f32 to vector<1x128xf32>
    %149 = arith.mulf %147, %148 : vector<1x128xf32>
    %150 = arith.mulf %145, %145 : vector<1x128xf32>
    %cst_47 = arith.constant dense<0.000000e+00> : vector<128xf32>
    %151 = vector.multi_reduction <add>, %150, %cst_47 [0] : vector<1x128xf32> to vector<128xf32>
    %152 = vector.shape_cast %151 : vector<128xf32> to vector<1x128xf32>
    %cst_48 = arith.constant 1.000000e+00 : f32
    %153 = vector.broadcast %cst_48 : f32 to vector<1x128xf32>
    %154 = arith.mulf %152, %153 : vector<1x128xf32>
    %155 = arith.mulf %149, %149 : vector<1x128xf32>
    %156 = arith.subf %154, %155 : vector<1x128xf32>
    %cst_49 = arith.constant 0.000000e+00 : f32
    %157 = vector.broadcast %cst_49 : f32 to vector<1x128xf32>
    %158 = arith.maximumf %156, %157 : vector<1x128xf32>
    %159 = arith.subf %145, %149 : vector<1x128xf32>
    %cst_50 = arith.constant 9.99999974E-6 : f32
    %160 = vector.broadcast %cst_50 : f32 to vector<1x128xf32>
    %161 = arith.addf %158, %160 : vector<1x128xf32>
    %162 = math.rsqrt %161 : vector<1x128xf32>
    %163 = arith.mulf %159, %162 : vector<1x128xf32>
    %164 = vector.broadcast %139 : vector<1x1xf32> to vector<1x128xf32>
    %165 = arith.mulf %163, %164 : vector<1x128xf32>
    %166 = vector.broadcast %140 : vector<1x1xf32> to vector<1x128xf32>
    %167 = arith.addf %165, %166 : vector<1x128xf32>
    %cst_51 = arith.constant 0.000000e+00 : f32
    %168 = vector.broadcast %cst_51 : f32 to vector<1x128xf32>
    %169 = arith.maximumf %167, %168 : vector<1x128xf32>
    %c0_52 = arith.constant 0 : index
    %c0_53 = arith.constant 0 : index
    %170 = vector.load %arg8[%c0_52, %c0_53] : memref<1x128xf32, #tpu.memory_space<vmem>>, vector<1x128xf32>
    tpu.vector_store %arg8[%c0_52, %c0_53], %169 {strides = array<i32>} : memref<1x128xf32, #tpu.memory_space<vmem>>, vector<1x128xf32>,
    return
  }
  func.func @transform_0(%arg0: i32) -> (i32, i32) {
    %c0_i32 = arith.constant 0 : i32
    %c0_i32_0 = arith.constant 0 : i32
    return %c0_i32, %arg0 : i32, i32
  }
  func.func @transform_1(%arg0: i32) -> (i32, i32) {
    %c0_i32 = arith.constant 0 : i32
    %c0_i32_0 = arith.constant 0 : i32
    %c0_i32_1 = arith.constant 0 : i32
    return %c0_i32, %c0_i32_0 : i32, i32
  }
  func.func @transform_2(%arg0: i32) -> (i32, i32) {
    %c0_i32 = arith.constant 0 : i32
    %c0_i32_0 = arith.constant 0 : i32
    %c0_i32_1 = arith.constant 0 : i32
    return %c0_i32, %c0_i32_0 : i32, i32
  }
  func.func @transform_3(%arg0: i32) -> (i32, i32) {
    %c0_i32 = arith.constant 0 : i32
    %c0_i32_0 = arith.constant 0 : i32
    %c0_i32_1 = arith.constant 0 : i32
    return %c0_i32, %c0_i32_0 : i32, i32
  }
  func.func @transform_4(%arg0: i32) -> (i32, i32) {
    %c0_i32 = arith.constant 0 : i32
    %c0_i32_0 = arith.constant 0 : i32
    %c0_i32_1 = arith.constant 0 : i32
    return %c0_i32, %c0_i32_0 : i32, i32
  }
  func.func @transform_5(%arg0: i32) -> (i32, i32) {
    %c0_i32 = arith.constant 0 : i32
    %c0_i32_0 = arith.constant 0 : i32
    %c0_i32_1 = arith.constant 0 : i32
    return %c0_i32, %c0_i32_0 : i32, i32
  }
  func.func @transform_6(%arg0: i32) -> (i32, i32) {
    %c0_i32 = arith.constant 0 : i32
    %c0_i32_0 = arith.constant 0 : i32
    %c0_i32_1 = arith.constant 0 : i32
    return %c0_i32, %c0_i32_0 : i32, i32
  }
  func.func @transform_7(%arg0: i32) -> (i32, i32) {
    %c0_i32 = arith.constant 0 : i32
    %c0_i32_0 = arith.constant 0 : i32
    return %c0_i32, %arg0 : i32, i32
  }
}

</mosaic_0001>

<llo_original>
// kernel: mlp_forward.1
$region0: #{mlp_forward.1}
  #allocation0 [shape = 'u32[]', space=smem, size = 0x4, offset = 0x4, fixed_abs, tag = 'smem constant byte address 0x4 - core index']
  #allocation1 [shape = 'u32[144,128]{1,0:T(1,128)}', space=vmem, size = 0x12000, scoped, tag = 'internal scratch']
  %s0 = inlined_call_operand.vmem [shape: f32[10,128], index: 0, kind: input, shape index: {}]
  %s1 = inlined_call_operand.vmem [shape: bf16[32,10], index: 1, kind: input, shape index: {}]
  %s2 = inlined_call_operand.vmem [shape: bf16[64,32], index: 2, kind: input, shape index: {}]
  %s3 = inlined_call_operand.vmem [shape: bf16[64,64], index: 3, kind: input, shape index: {}]
  %s4 = inlined_call_operand.vmem [shape: bf16[64,64], index: 4, kind: input, shape index: {}]
  %s5 = inlined_call_operand.vmem [shape: bf16[1,64], index: 5, kind: input, shape index: {}]
  %s6 = inlined_call_operand.vmem [shape: f32[64,15], index: 6, kind: input, shape index: {}]
  %s7 = inlined_call_operand.vmem [shape: f32[1,128], index: 7, kind: output, shape index: {}]
  %s8 = sld [smem:[#allocation0]]
  $region38: #{mlp_forward.1} parent=0
    _
  %s10 = ssub.s32 1, %s8
  %s11 = scalar_select 0, %s10, %s8
  // Predicated region
  $region2: #{mlp_forward.1} parent=0 // pred_check
    _
  $region3: #{mlp_forward.1} parent=0 // pred_check_branch
    %13 = sbr.rel (0) target = $region5
  $region4: #{mlp_forward.1} parent=0 // pred_region
    _
  $region5: #{mlp_forward.1} parent=0 // pred_fallthru
    _
  // Predicated region
  $region6: #{mlp_forward.1} parent=0 // pred_check
    _
  $region7: #{mlp_forward.1} parent=0 // pred_check_branch
    %15 = sbr.rel (0) target = $region9
  $region8: #{mlp_forward.1} parent=0 // pred_region
    _
  $region9: #{mlp_forward.1} parent=0 // pred_fallthru
    _
  // Predicated region
  $region10: #{mlp_forward.1} parent=0 // pred_check
    _
  $region11: #{mlp_forward.1} parent=0 // pred_check_branch
    %17 = sbr.rel (0) target = $region13
  $region12: #{mlp_forward.1} parent=0 // pred_region
    _
  $region13: #{mlp_forward.1} parent=0 // pred_fallthru
    _
  // Predicated region
  $region14: #{mlp_forward.1} parent=0 // pred_check
    _
  $region15: #{mlp_forward.1} parent=0 // pred_check_branch
    %19 = sbr.rel (0) target = $region17
  $region16: #{mlp_forward.1} parent=0 // pred_region
    _
  $region17: #{mlp_forward.1} parent=0 // pred_fallthru
    _
  // Predicated region
  $region18: #{mlp_forward.1} parent=0 // pred_check
    _
  $region19: #{mlp_forward.1} parent=0 // pred_check_branch
    %21 = sbr.rel (0) target = $region21
  $region20: #{mlp_forward.1} parent=0 // pred_region
    _
  $region21: #{mlp_forward.1} parent=0 // pred_fallthru
    _
  // Predicated region
  $region22: #{mlp_forward.1} parent=0 // pred_check
    _
  $region23: #{mlp_forward.1} parent=0 // pred_check_branch
    %23 = sbr.rel (0) target = $region25
  $region24: #{mlp_forward.1} parent=0 // pred_region
    _
  $region25: #{mlp_forward.1} parent=0 // pred_fallthru
    _
  // Predicated region
  $region26: #{mlp_forward.1} parent=0 // pred_check
    _
  $region27: #{mlp_forward.1} parent=0 // pred_check_branch
    %25 = sbr.rel (0) target = $region29
  $region28: #{mlp_forward.1} parent=0 // pred_region
    _
  $region29: #{mlp_forward.1} parent=0 // pred_fallthru
    _
  %v27 = vld [vmem:[%s6] sm:$0xff]
  %v28 = vld [vmem:[%s6 + $0x8] sm:$0xff]
  %v29 = vld [vmem:[%s6 + $0x10] sm:$0xff]
  %v30 = vld [vmem:[%s6 + $0x18] sm:$0xff]
  %v31 = vld [vmem:[%s6 + $0x20] sm:$0xff]
  %v32 = vld [vmem:[%s6 + $0x28] sm:$0xff]
  %v33 = vld [vmem:[%s6 + $0x30] sm:$0xff]
  %v34 = vld [vmem:[%s6 + $0x38] sm:$0xff]
  %v35 = vld [vmem:[%s0] sm:$0xff]
  %v36 = vld [vmem:[%s0 + $0x8] sm:$0x3]
  %v37 = vld [vmem:[%s1] sm:$0xf]
  %v38 = vld [vmem:[%s1 + $0x4] sm:$0xf]
  %v39 = vld [vmem:[%s1 + $0x8] sm:$0xf]
  %v40 = vld [vmem:[%s1 + $0xc] sm:$0xf]
  %v41 = vpack.c.bf16 %v36, %v35
  %43 = vset.pattern.permute.xlu0 0
  %44 = vperm.xlu0 %43, %v27
  %v45 = vpop.permute.xlu0 %44
  %48 = vset.pattern.permute.xlu0 0
  %49 = vperm.xlu0 %48, %v28
  %v50 = vpop.permute.xlu0 %49
  %53 = vset.pattern.permute.xlu0 0
  %54 = vperm.xlu0 %53, %v29
  %v55 = vpop.permute.xlu0 %54
  %58 = vset.pattern.permute.xlu0 0
  %59 = vperm.xlu0 %58, %v30
  %v60 = vpop.permute.xlu0 %59
  %v66 = vunpack.c.l.b16 %v37
  %v67 = vunpack.c.l.b16 %v38
  %v68 = vunpack.c.l.b16 %v39
  %v69 = vunpack.c.l.b16 %v40
  %v70 = vpack.c.b16 %v67, %v66
  %v71 = vpack.c.b16 %v69, %v68
  %vm72 = vcmask 80896
  %v74 = vsel %vm72, %v70, 0
  %v77 = vsel %vm72, %v71, 0
  %vm79 = vcmask 1044480
  %v81 = vsel %vm79, %v41, 0
  %83 = vmatprep.subr.bf16.mxu0 0
  %84 = vmatpush1.bf16.msra.mxu0 %v81
  %85 = vmatprep.subr.bf16.mxu0 0
  %86 = vmatpush1.bf16.msra.mxu0 0
  %87 = vmatprep.subr.bf16.mxu0 0
  %88 = vmatpush1.bf16.msra.mxu0 0
  %89 = vmatprep.subr.bf16.mxu0 0
  %90 = vmatpush1.bf16.msra.mxu0 0
  %91 = vmatprep.subr.bf16.mxu0 0
  %92 = vmatpush1.bf16.msra.mxu0 0
  %93 = vmatprep.subr.bf16.mxu0 0
  %94 = vmatpush1.bf16.msra.mxu0 0
  %95 = vmatprep.subr.bf16.mxu0 0
  %96 = vmatpush1.bf16.msra.mxu0 0
  %97 = vmatprep.subr.bf16.mxu0 0
  %98 = vmatpush1.bf16.msra.mxu0 0
  %99 = vmatprep.subr.bf16.mxu0 0
  %100 = vmatpush1.bf16.msra.mxu0 0
  %101 = vmatprep.subr.bf16.mxu0 0
  %102 = vmatpush1.bf16.msra.mxu0 0
  %103 = vmatprep.subr.bf16.mxu0 0
  %104 = vmatpush1.bf16.msra.mxu0 0
  %105 = vmatprep.subr.bf16.mxu0 0
  %106 = vmatpush1.bf16.msra.mxu0 0
  %107 = vmatprep.subr.bf16.mxu0 0
  %108 = vmatpush1.bf16.msra.mxu0 0
  %109 = vmatprep.subr.bf16.mxu0 0
  %110 = vmatpush1.bf16.msra.mxu0 0
  %111 = vmatprep.subr.bf16.mxu0 0
  %112 = vmatpush1.bf16.msra.mxu0 0
  %113 = vmatprep.subr.bf16.mxu0 0
  %114 = vmatpush1.bf16.msra.mxu0 0
  %115 = vmatprep.mubr.bf16.mxu0 0
  %116 = vmatmul.mubr.bf16.gmra.mrb[0].mxu0 %v74
  %v117 = vpop.f32.mrb[0].mxu0
  %v118 = vadd.f32 %v45, %v117
  %v119 = vpop.f32.mrb[0].mxu0
  %v120 = vpop.f32.mrb[0].mxu0
  %v121 = vadd.f32 %v50, %v120
  %v122 = vpop.f32.mrb[0].mxu0
  %123 = vmatprep.mubr.bf16.mxu0 0
  %124 = vmatmul.mubr.bf16.gmra.mrb[0].mxu0 %v77
  %v125 = vpop.f32.mrb[0].mxu0
  %v126 = vadd.f32 %v55, %v125
  %v127 = vpop.f32.mrb[0].mxu0
  %v128 = vpop.f32.mrb[0].mxu0
  %v129 = vadd.f32 %v60, %v128
  %v130 = vpop.f32.mrb[0].mxu0
  %131 = vdwg.mxu0
  %v132 = vadd.f32 %v118, %v121
  %v133 = vadd.f32 %v132, %v126
  %v134 = vadd.f32 %v133, %v129
  %v135 = vrot.slane %v134, 4
  %v136 = vadd.f32 %v134, %v135
  %v137 = vrot.slane %v136, 2
  %v138 = vadd.f32 %v136, %v137
  %v139 = vrot.slane %v138, 1
  %v140 = vadd.f32 %v138, %v139
  %v141 = vmul.f32 %v140, 0.03125
  %v142 = vmul.f32 %v118, %v118
  %v143 = vmul.f32 %v121, %v121
  %v144 = vmul.f32 %v126, %v126
  %v145 = vmul.f32 %v129, %v129
  %v146 = vadd.f32 %v142, %v143
  %v147 = vadd.f32 %v146, %v144
  %v148 = vadd.f32 %v147, %v145
  %v149 = vrot.slane %v148, 4
  %v150 = vadd.f32 %v148, %v149
  %v151 = vrot.slane %v150, 2
  %v152 = vadd.f32 %v150, %v151
  %v153 = vrot.slane %v152, 1
  %v154 = vadd.f32 %v152, %v153
  %v155 = vmul.f32 %v154, 0.03125
  %v156 = vmul.f32 %v141, %v141
  %v157 = vsub.f32 %v155, %v156
  %v158 = vmax.f32 %v157, 0.0
  %v159 = vsub.f32 %v118, %v141
  %v160 = vsub.f32 %v121, %v141
  %v161 = vsub.f32 %v126, %v141
  %v162 = vsub.f32 %v129, %v141
  %v163 = vadd.f32 %v158, 1e-05
  %v164 = vrsqrt.pop %v163
  %v165 = vmul.f32 %v159, %v164
  %v166 = vmul.f32 %v160, %v164
  %v167 = vmul.f32 %v161, %v164
  %v168 = vmul.f32 %v162, %v164
  %169 = vset.pattern.permute.xlu0 1
  %170 = vperm.xlu0 %169, %v27
  %v171 = vpop.permute.xlu0 %170
  %173 = vset.pattern.permute.xlu0 1
  %174 = vperm.xlu0 %173, %v28
  %v175 = vpop.permute.xlu0 %174
  %177 = vset.pattern.permute.xlu0 1
  %178 = vperm.xlu0 %177, %v29
  %v179 = vpop.permute.xlu0 %178
  %181 = vset.pattern.permute.xlu0 1
  %182 = vperm.xlu0 %181, %v30
  %v183 = vpop.permute.xlu0 %182
  %v185 = vmul.f32 %v165, %v171
  %v186 = vmul.f32 %v166, %v175
  %v187 = vmul.f32 %v167, %v179
  %v188 = vmul.f32 %v168, %v183
  %189 = vset.pattern.permute.xlu0 2
  %190 = vperm.xlu0 %189, %v27
  %v191 = vpop.permute.xlu0 %190
  %193 = vset.pattern.permute.xlu0 2
  %194 = vperm.xlu0 %193, %v28
  %v195 = vpop.permute.xlu0 %194
  %197 = vset.pattern.permute.xlu0 2
  %198 = vperm.xlu0 %197, %v29
  %v199 = vpop.permute.xlu0 %198
  %201 = vset.pattern.permute.xlu0 2
  %202 = vperm.xlu0 %201, %v30
  %v203 = vpop.permute.xlu0 %202
  %v205 = vadd.f32 %v185, %v191
  %v206 = vadd.f32 %v186, %v195
  %v207 = vadd.f32 %v187, %v199
  %v208 = vadd.f32 %v188, %v203
  %v209 = vmax.f32 %v205, 0.0
  %v210 = vmax.f32 %v206, 0.0
  %v211 = vmax.f32 %v207, 0.0
  %v212 = vmax.f32 %v208, 0.0
  %v213 = vld [vmem:[%s2] sm:$0xf]
  %v214 = vld [vmem:[%s2 + $0x4] sm:$0xf]
  %v215 = vld [vmem:[%s2 + $0x8] sm:$0xf]
  %v216 = vld [vmem:[%s2 + $0xc] sm:$0xf]
  %v217 = vld [vmem:[%s2 + $0x10] sm:$0xf]
  %v218 = vld [vmem:[%s2 + $0x14] sm:$0xf]
  %v219 = vld [vmem:[%s2 + $0x18] sm:$0xf]
  %v220 = vld [vmem:[%s2 + $0x1c] sm:$0xf]
  %v221 = vpack.c.bf16 %v210, %v209
  %v222 = vpack.c.bf16 %v212, %v211
  %223 = vset.pattern.permute.xlu0 3
  %224 = vperm.xlu0 %223, %v27
  %v225 = vpop.permute.xlu0 %224
  %227 = vset.pattern.permute.xlu0 3
  %228 = vperm.xlu0 %227, %v28
  %v229 = vpop.permute.xlu0 %228
  %231 = vset.pattern.permute.xlu0 3
  %232 = vperm.xlu0 %231, %v29
  %v233 = vpop.permute.xlu0 %232
  %235 = vset.pattern.permute.xlu0 3
  %236 = vperm.xlu0 %235, %v30
  %v237 = vpop.permute.xlu0 %236
  %240 = vset.pattern.permute.xlu0 3
  %241 = vperm.xlu0 %240, %v31
  %v242 = vpop.permute.xlu0 %241
  %245 = vset.pattern.permute.xlu0 3
  %246 = vperm.xlu0 %245, %v32
  %v247 = vpop.permute.xlu0 %246
  %250 = vset.pattern.permute.xlu0 3
  %251 = vperm.xlu0 %250, %v33
  %v252 = vpop.permute.xlu0 %251
  %255 = vset.pattern.permute.xlu0 3
  %256 = vperm.xlu0 %255, %v34
  %v257 = vpop.permute.xlu0 %256
  %v267 = vunpack.c.l.b16 %v213
  %v268 = vunpack.c.l.b16 %v214
  %v269 = vunpack.c.l.b16 %v215
  %v270 = vunpack.c.l.b16 %v216
  %v271 = vunpack.c.l.b16 %v217
  %v272 = vunpack.c.l.b16 %v218
  %v273 = vunpack.c.l.b16 %v219
  %v274 = vunpack.c.l.b16 %v220
  %v275 = vpack.c.b16 %v268, %v267
  %v276 = vpack.c.b16 %v270, %v269
  %v277 = vpack.c.b16 %v272, %v271
  %v278 = vpack.c.b16 %v274, %v273
  %vm279 = vcmask 261120
  %v281 = vsel %vm279, %v275, 0
  %v284 = vsel %vm279, %v276, 0
  %v287 = vsel %vm279, %v277, 0
  %v290 = vsel %vm279, %v278, 0
  %292 = vmatprep.subr.bf16.mxu0 0
  %293 = vmatpush1.bf16.msra.mxu0 %v221
  %294 = vmatprep.subr.bf16.mxu0 0
  %295 = vmatpush1.bf16.msra.mxu0 %v222
  %296 = vmatprep.subr.bf16.mxu0 0
  %297 = vmatpush1.bf16.msra.mxu0 0
  %298 = vmatprep.subr.bf16.mxu0 0
  %299 = vmatpush1.bf16.msra.mxu0 0
  %300 = vmatprep.subr.bf16.mxu0 0
  %301 = vmatpush1.bf16.msra.mxu0 0
  %302 = vmatprep.subr.bf16.mxu0 0
  %303 = vmatpush1.bf16.msra.mxu0 0
  %304 = vmatprep.subr.bf16.mxu0 0
  %305 = vmatpush1.bf16.msra.mxu0 0
  %306 = vmatprep.subr.bf16.mxu0 0
  %307 = vmatpush1.bf16.msra.mxu0 0
  %308 = vmatprep.subr.bf16.mxu0 0
  %309 = vmatpush1.bf16.msra.mxu0 0
  %310 = vmatprep.subr.bf16.mxu0 0
  %311 = vmatpush1.bf16.msra.mxu0 0
  %312 = vmatprep.subr.bf16.mxu0 0
  %313 = vmatpush1.bf16.msra.mxu0 0
  %314 = vmatprep.subr.bf16.mxu0 0
  %315 = vmatpush1.bf16.msra.mxu0 0
  %316 = vmatprep.subr.bf16.mxu0 0
  %317 = vmatpush1.bf16.msra.mxu0 0
  %318 = vmatprep.subr.bf16.mxu0 0
  %319 = vmatpush1.bf16.msra.mxu0 0
  %320 = vmatprep.subr.bf16.mxu0 0
  %321 = vmatpush1.bf16.msra.mxu0 0
  %322 = vmatprep.subr.bf16.mxu0 0
  %323 = vmatpush1.bf16.msra.mxu0 0
  %324 = vmatprep.mubr.bf16.mxu0 0
  %325 = vmatmul.mubr.bf16.gmra.mrb[0].mxu0 %v281
  %v326 = vpop.f32.mrb[0].mxu0
  %v327 = vadd.f32 %v225, %v326
  %v328 = vpop.f32.mrb[0].mxu0
  %v329 = vpop.f32.mrb[0].mxu0
  %v330 = vadd.f32 %v229, %v329
  %v331 = vpop.f32.mrb[0].mxu0
  %332 = vmatprep.mubr.bf16.mxu0 0
  %333 = vmatmul.mubr.bf16.gmra.mrb[0].mxu0 %v284
  %v334 = vpop.f32.mrb[0].mxu0
  %v335 = vadd.f32 %v233, %v334
  %v336 = vpop.f32.mrb[0].mxu0
  %v337 = vpop.f32.mrb[0].mxu0
  %v338 = vadd.f32 %v237, %v337
  %v339 = vpop.f32.mrb[0].mxu0
  %340 = vmatprep.mubr.bf16.mxu0 0
  %341 = vmatmul.mubr.bf16.gmra.mrb[0].mxu0 %v287
  %v342 = vpop.f32.mrb[0].mxu0
  %v343 = vadd.f32 %v242, %v342
  %v344 = vpop.f32.mrb[0].mxu0
  %v345 = vpop.f32.mrb[0].mxu0
  %v346 = vadd.f32 %v247, %v345
  %v347 = vpop.f32.mrb[0].mxu0
  %348 = vmatprep.mubr.bf16.mxu0 0
  %349 = vmatmul.mubr.bf16.gmra.mrb[0].mxu0 %v290
  %v350 = vpop.f32.mrb[0].mxu0
  %v351 = vadd.f32 %v252, %v350
  %v352 = vpop.f32.mrb[0].mxu0
  %v353 = vpop.f32.mrb[0].mxu0
  %v354 = vadd.f32 %v257, %v353
  %v355 = vpop.f32.mrb[0].mxu0
  %356 = vdwg.mxu0
  %v357 = vadd.f32 %v327, %v330
  %v358 = vadd.f32 %v357, %v335
  %v359 = vadd.f32 %v358, %v338
  %v360 = vadd.f32 %v359, %v343
  %v361 = vadd.f32 %v360, %v346
  %v362 = vadd.f32 %v361, %v351
  %v363 = vadd.f32 %v362, %v354
  %v364 = vrot.slane %v363, 4
  %v365 = vadd.f32 %v363, %v364
  %v366 = vrot.slane %v365, 2
  %v367 = vadd.f32 %v365, %v366
  %v368 = vrot.slane %v367, 1
  %v369 = vadd.f32 %v367, %v368
  %v370 = vmul.f32 %v369, 0.015625
  %v371 = vmul.f32 %v327, %v327
  %v372 = vmul.f32 %v330, %v330
  %v373 = vmul.f32 %v335, %v335
  %v374 = vmul.f32 %v338, %v338
  %v375 = vmul.f32 %v343, %v343
  %v376 = vmul.f32 %v346, %v346
  %v377 = vmul.f32 %v351, %v351
  %v378 = vmul.f32 %v354, %v354
  %v379 = vadd.f32 %v371, %v372
  %v380 = vadd.f32 %v379, %v373
  %v381 = vadd.f32 %v380, %v374
  %v382 = vadd.f32 %v381, %v375
  %v383 = vadd.f32 %v382, %v376
  %v384 = vadd.f32 %v383, %v377
  %v385 = vadd.f32 %v384, %v378
  %v386 = vrot.slane %v385, 4
  %v387 = vadd.f32 %v385, %v386
  %v388 = vrot.slane %v387, 2
  %v389 = vadd.f32 %v387, %v388
  %v390 = vrot.slane %v389, 1
  %v391 = vadd.f32 %v389, %v390
  %v392 = vmul.f32 %v391, 0.015625
  %v393 = vmul.f32 %v370, %v370
  %v394 = vsub.f32 %v392, %v393
  %v395 = vmax.f32 %v394, 0.0
  %v396 = vsub.f32 %v327, %v370
  %v397 = vsub.f32 %v330, %v370
  %v398 = vsub.f32 %v335, %v370
  %v399 = vsub.f32 %v338, %v370
  %v400 = vsub.f32 %v343, %v370
  %v401 = vsub.f32 %v346, %v370
  %v402 = vsub.f32 %v351, %v370
  %v403 = vsub.f32 %v354, %v370
  %v404 = vadd.f32 %v395, 1e-05
  %v405 = vrsqrt.pop %v404
  %v406 = vmul.f32 %v396, %v405
  %v407 = vmul.f32 %v397, %v405
  %v408 = vmul.f32 %v398, %v405
  %v409 = vmul.f32 %v399, %v405
  %v410 = vmul.f32 %v400, %v405
  %v411 = vmul.f32 %v401, %v405
  %v412 = vmul.f32 %v402, %v405
  %v413 = vmul.f32 %v403, %v405
  %414 = vset.pattern.permute.xlu0 4
  %415 = vperm.xlu0 %414, %v27
  %v416 = vpop.permute.xlu0 %415
  %418 = vset.pattern.permute.xlu0 4
  %419 = vperm.xlu0 %418, %v28
  %v420 = vpop.permute.xlu0 %419
  %422 = vset.pattern.permute.xlu0 4
  %423 = vperm.xlu0 %422, %v29
  %v424 = vpop.permute.xlu0 %423
  %426 = vset.pattern.permute.xlu0 4
  %427 = vperm.xlu0 %426, %v30
  %v428 = vpop.permute.xlu0 %427
  %430 = vset.pattern.permute.xlu0 4
  %431 = vperm.xlu0 %430, %v31
  %v432 = vpop.permute.xlu0 %431
  %434 = vset.pattern.permute.xlu0 4
  %435 = vperm.xlu0 %434, %v32
  %v436 = vpop.permute.xlu0 %435
  %438 = vset.pattern.permute.xlu0 4
  %439 = vperm.xlu0 %438, %v33
  %v440 = vpop.permute.xlu0 %439
  %442 = vset.pattern.permute.xlu0 4
  %443 = vperm.xlu0 %442, %v34
  %v444 = vpop.permute.xlu0 %443
  %v446 = vmul.f32 %v406, %v416
  %v447 = vmul.f32 %v407, %v420
  %v448 = vmul.f32 %v408, %v424
  %v449 = vmul.f32 %v409, %v428
  %v450 = vmul.f32 %v410, %v432
  %v451 = vmul.f32 %v411, %v436
  %v452 = vmul.f32 %v412, %v440
  %v453 = vmul.f32 %v413, %v444
  %454 = vset.pattern.permute.xlu0 5
  %455 = vperm.xlu0 %454, %v27
  %v456 = vpop.permute.xlu0 %455
  %458 = vset.pattern.permute.xlu0 5
  %459 = vperm.xlu0 %458, %v28
  %v460 = vpop.permute.xlu0 %459
  %462 = vset.pattern.permute.xlu0 5
  %463 = vperm.xlu0 %462, %v29
  %v464 = vpop.permute.xlu0 %463
  %466 = vset.pattern.permute.xlu0 5
  %467 = vperm.xlu0 %466, %v30
  %v468 = vpop.permute.xlu0 %467
  %470 = vset.pattern.permute.xlu0 5
  %471 = vperm.xlu0 %470, %v31
  %v472 = vpop.permute.xlu0 %471
  %474 = vset.pattern.permute.xlu0 5
  %475 = vperm.xlu0 %474, %v32
  %v476 = vpop.permute.xlu0 %475
  %478 = vset.pattern.permute.xlu0 5
  %479 = vperm.xlu0 %478, %v33
  %v480 = vpop.permute.xlu0 %479
  %482 = vset.pattern.permute.xlu0 5
  %483 = vperm.xlu0 %482, %v34
  %v484 = vpop.permute.xlu0 %483
  %v486 = vadd.f32 %v446, %v456
  %v487 = vadd.f32 %v447, %v460
  %v488 = vadd.f32 %v448, %v464
  %v489 = vadd.f32 %v449, %v468
  %v490 = vadd.f32 %v450, %v472
  %v491 = vadd.f32 %v451, %v476
  %v492 = vadd.f32 %v452, %v480
  %v493 = vadd.f32 %v453, %v484
  %v494 = vmax.f32 %v486, 0.0
  %v495 = vmax.f32 %v487, 0.0
  %v496 = vmax.f32 %v488, 0.0
  %v497 = vmax.f32 %v489, 0.0
  %v498 = vmax.f32 %v490, 0.0
  %v499 = vmax.f32 %v491, 0.0
  %v500 = vmax.f32 %v492, 0.0
  %v501 = vmax.f32 %v493, 0.0
  %v502 = vld [vmem:[%s3] sm:$0xf]
  %v503 = vld [vmem:[%s3 + $0x4] sm:$0xf]
  %v504 = vld [vmem:[%s3 + $0x8] sm:$0xf]
  %v505 = vld [vmem:[%s3 + $0xc] sm:$0xf]
  %v506 = vld [vmem:[%s3 + $0x10] sm:$0xf]
  %v507 = vld [vmem:[%s3 + $0x14] sm:$0xf]
  %v508 = vld [vmem:[%s3 + $0x18] sm:$0xf]
  %v509 = vld [vmem:[%s3 + $0x1c] sm:$0xf]
  %v510 = vpack.c.bf16 %v495, %v494
  %v511 = vpack.c.bf16 %v497, %v496
  %v512 = vpack.c.bf16 %v499, %v498
  %v513 = vpack.c.bf16 %v501, %v500
  %514 = vset.pattern.permute.xlu0 6
  %515 = vperm.xlu0 %514, %v27
  %v516 = vpop.permute.xlu0 %515
  %518 = vset.pattern.permute.xlu0 6
  %519 = vperm.xlu0 %518, %v28
  %v520 = vpop.permute.xlu0 %519
  %522 = vset.pattern.permute.xlu0 6
  %523 = vperm.xlu0 %522, %v29
  %v524 = vpop.permute.xlu0 %523
  %526 = vset.pattern.permute.xlu0 6
  %527 = vperm.xlu0 %526, %v30
  %v528 = vpop.permute.xlu0 %527
  %530 = vset.pattern.permute.xlu0 6
  %531 = vperm.xlu0 %530, %v31
  %v532 = vpop.permute.xlu0 %531
  %534 = vset.pattern.permute.xlu0 6
  %535 = vperm.xlu0 %534, %v32
  %v536 = vpop.permute.xlu0 %535
  %538 = vset.pattern.permute.xlu0 6
  %539 = vperm.xlu0 %538, %v33
  %v540 = vpop.permute.xlu0 %539
  %542 = vset.pattern.permute.xlu0 6
  %543 = vperm.xlu0 %542, %v34
  %v544 = vpop.permute.xlu0 %543
  %v554 = vunpack.c.l.b16 %v502
  %v555 = vunpack.c.l.b16 %v503
  %v556 = vunpack.c.l.b16 %v504
  %v557 = vunpack.c.l.b16 %v505
  %v558 = vunpack.c.l.b16 %v506
  %v559 = vunpack.c.l.b16 %v507
  %v560 = vunpack.c.l.b16 %v508
  %v561 = vunpack.c.l.b16 %v509
  %v562 = vpack.c.b16 %v555, %v554
  %v563 = vpack.c.b16 %v557, %v556
  %v564 = vpack.c.b16 %v559, %v558
  %v565 = vpack.c.b16 %v561, %v560
  %vm566 = vcmask 523264
  %v568 = vsel %vm566, %v562, 0
  %v571 = vsel %vm566, %v563, 0
  %v574 = vsel %vm566, %v564, 0
  %v577 = vsel %vm566, %v565, 0
  %579 = vmatprep.subr.bf16.mxu0 0
  %580 = vmatpush1.bf16.msra.mxu0 %v510
  %581 = vmatprep.subr.bf16.mxu0 0
  %582 = vmatpush1.bf16.msra.mxu0 %v511
  %583 = vmatprep.subr.bf16.mxu0 0
  %584 = vmatpush1.bf16.msra.mxu0 %v512
  %585 = vmatprep.subr.bf16.mxu0 0
  %586 = vmatpush1.bf16.msra.mxu0 %v513
  %587 = vmatprep.subr.bf16.mxu0 0
  %588 = vmatpush1.bf16.msra.mxu0 0
  %589 = vmatprep.subr.bf16.mxu0 0
  %590 = vmatpush1.bf16.msra.mxu0 0
  %591 = vmatprep.subr.bf16.mxu0 0
  %592 = vmatpush1.bf16.msra.mxu0 0
  %593 = vmatprep.subr.bf16.mxu0 0
  %594 = vmatpush1.bf16.msra.mxu0 0
  %595 = vmatprep.subr.bf16.mxu0 0
  %596 = vmatpush1.bf16.msra.mxu0 0
  %597 = vmatprep.subr.bf16.mxu0 0
  %598 = vmatpush1.bf16.msra.mxu0 0
  %599 = vmatprep.subr.bf16.mxu0 0
  %600 = vmatpush1.bf16.msra.mxu0 0
  %601 = vmatprep.subr.bf16.mxu0 0
  %602 = vmatpush1.bf16.msra.mxu0 0
  %603 = vmatprep.subr.bf16.mxu0 0
  %604 = vmatpush1.bf16.msra.mxu0 0
  %605 = vmatprep.subr.bf16.mxu0 0
  %606 = vmatpush1.bf16.msra.mxu0 0
  %607 = vmatprep.subr.bf16.mxu0 0
  %608 = vmatpush1.bf16.msra.mxu0 0
  %609 = vmatprep.subr.bf16.mxu0 0
  %610 = vmatpush1.bf16.msra.mxu0 0
  %611 = vmatprep.mubr.bf16.mxu0 0
  %612 = vmatmul.mubr.bf16.gmra.mrb[0].mxu0 %v568
  %v613 = vpop.f32.mrb[0].mxu0
  %v614 = vadd.f32 %v516, %v613
  %v615 = vpop.f32.mrb[0].mxu0
  %v616 = vpop.f32.mrb[0].mxu0
  %v617 = vadd.f32 %v520, %v616
  %v618 = vpop.f32.mrb[0].mxu0
  %619 = vmatprep.mubr.bf16.mxu0 0
  %620 = vmatmul.mubr.bf16.gmra.mrb[0].mxu0 %v571
  %v621 = vpop.f32.mrb[0].mxu0
  %v622 = vadd.f32 %v524, %v621
  %v623 = vpop.f32.mrb[0].mxu0
  %v624 = vpop.f32.mrb[0].mxu0
  %v625 = vadd.f32 %v528, %v624
  %v626 = vpop.f32.mrb[0].mxu0
  %627 = vmatprep.mubr.bf16.mxu0 0
  %628 = vmatmul.mubr.bf16.gmra.mrb[0].mxu0 %v574
  %v629 = vpop.f32.mrb[0].mxu0
  %v630 = vadd.f32 %v532, %v629
  %v631 = vpop.f32.mrb[0].mxu0
  %v632 = vpop.f32.mrb[0].mxu0
  %v633 = vadd.f32 %v536, %v632
  %v634 = vpop.f32.mrb[0].mxu0
  %635 = vmatprep.mubr.bf16.mxu0 0
  %636 = vmatmul.mubr.bf16.gmra.mrb[0].mxu0 %v577
  %v637 = vpop.f32.mrb[0].mxu0
  %v638 = vadd.f32 %v540, %v637
  %v639 = vpop.f32.mrb[0].mxu0
  %v640 = vpop.f32.mrb[0].mxu0
  %v641 = vadd.f32 %v544, %v640
  %v642 = vpop.f32.mrb[0].mxu0
  %643 = vdwg.mxu0
  %v644 = vadd.f32 %v614, %v617
  %v645 = vadd.f32 %v644, %v622
  %v646 = vadd.f32 %v645, %v625
  %v647 = vadd.f32 %v646, %v630
  %v648 = vadd.f32 %v647, %v633
  %v649 = vadd.f32 %v648, %v638
  %v650 = vadd.f32 %v649, %v641
  %v651 = vrot.slane %v650, 4
  %v652 = vadd.f32 %v650, %v651
  %v653 = vrot.slane %v652, 2
  %v654 = vadd.f32 %v652, %v653
  %v655 = vrot.slane %v654, 1
  %v656 = vadd.f32 %v654, %v655
  %v657 = vmul.f32 %v656, 0.015625
  %v658 = vmul.f32 %v614, %v614
  %v659 = vmul.f32 %v617, %v617
  %v660 = vmul.f32 %v622, %v622
  %v661 = vmul.f32 %v625, %v625
  %v662 = vmul.f32 %v630, %v630
  %v663 = vmul.f32 %v633, %v633
  %v664 = vmul.f32 %v638, %v638
  %v665 = vmul.f32 %v641, %v641
  %v666 = vadd.f32 %v658, %v659
  %v667 = vadd.f32 %v666, %v660
  %v668 = vadd.f32 %v667, %v661
  %v669 = vadd.f32 %v668, %v662
  %v670 = vadd.f32 %v669, %v663
  %v671 = vadd.f32 %v670, %v664
  %v672 = vadd.f32 %v671, %v665
  %v673 = vrot.slane %v672, 4
  %v674 = vadd.f32 %v672, %v673
  %v675 = vrot.slane %v674, 2
  %v676 = vadd.f32 %v674, %v675
  %v677 = vrot.slane %v676, 1
  %v678 = vadd.f32 %v676, %v677
  %v679 = vmul.f32 %v678, 0.015625
  %v680 = vmul.f32 %v657, %v657
  %v681 = vsub.f32 %v679, %v680
  %v682 = vmax.f32 %v681, 0.0
  %v683 = vsub.f32 %v614, %v657
  %v684 = vsub.f32 %v617, %v657
  %v685 = vsub.f32 %v622, %v657
  %v686 = vsub.f32 %v625, %v657
  %v687 = vsub.f32 %v630, %v657
  %v688 = vsub.f32 %v633, %v657
  %v689 = vsub.f32 %v638, %v657
  %v690 = vsub.f32 %v641, %v657
  %v691 = vadd.f32 %v682, 1e-05
  %v692 = vrsqrt.pop %v691
  %v693 = vmul.f32 %v683, %v692
  %v694 = vmul.f32 %v684, %v692
  %v695 = vmul.f32 %v685, %v692
  %v696 = vmul.f32 %v686, %v692
  %v697 = vmul.f32 %v687, %v692
  %v698 = vmul.f32 %v688, %v692
  %v699 = vmul.f32 %v689, %v692
  %v700 = vmul.f32 %v690, %v692
  %701 = vset.pattern.permute.xlu0 7
  %702 = vperm.xlu0 %701, %v27
  %v703 = vpop.permute.xlu0 %702
  %705 = vset.pattern.permute.xlu0 7
  %706 = vperm.xlu0 %705, %v28
  %v707 = vpop.permute.xlu0 %706
  %709 = vset.pattern.permute.xlu0 7
  %710 = vperm.xlu0 %709, %v29
  %v711 = vpop.permute.xlu0 %710
  %713 = vset.pattern.permute.xlu0 7
  %714 = vperm.xlu0 %713, %v30
  %v715 = vpop.permute.xlu0 %714
  %717 = vset.pattern.permute.xlu0 7
  %718 = vperm.xlu0 %717, %v31
  %v719 = vpop.permute.xlu0 %718
  %721 = vset.pattern.permute.xlu0 7
  %722 = vperm.xlu0 %721, %v32
  %v723 = vpop.permute.xlu0 %722
  %725 = vset.pattern.permute.xlu0 7
  %726 = vperm.xlu0 %725, %v33
  %v727 = vpop.permute.xlu0 %726
  %729 = vset.pattern.permute.xlu0 7
  %730 = vperm.xlu0 %729, %v34
  %v731 = vpop.permute.xlu0 %730
  %v733 = vmul.f32 %v693, %v703
  %v734 = vmul.f32 %v694, %v707
  %v735 = vmul.f32 %v695, %v711
  %v736 = vmul.f32 %v696, %v715
  %v737 = vmul.f32 %v697, %v719
  %v738 = vmul.f32 %v698, %v723
  %v739 = vmul.f32 %v699, %v727
  %v740 = vmul.f32 %v700, %v731
  %741 = vset.pattern.permute.xlu0 8
  %742 = vperm.xlu0 %741, %v27
  %v743 = vpop.permute.xlu0 %742
  %745 = vset.pattern.permute.xlu0 8
  %746 = vperm.xlu0 %745, %v28
  %v747 = vpop.permute.xlu0 %746
  %749 = vset.pattern.permute.xlu0 8
  %750 = vperm.xlu0 %749, %v29
  %v751 = vpop.permute.xlu0 %750
  %753 = vset.pattern.permute.xlu0 8
  %754 = vperm.xlu0 %753, %v30
  %v755 = vpop.permute.xlu0 %754
  %757 = vset.pattern.permute.xlu0 8
  %758 = vperm.xlu0 %757, %v31
  %v759 = vpop.permute.xlu0 %758
  %761 = vset.pattern.permute.xlu0 8
  %762 = vperm.xlu0 %761, %v32
  %v763 = vpop.permute.xlu0 %762
  %765 = vset.pattern.permute.xlu0 8
  %766 = vperm.xlu0 %765, %v33
  %v767 = vpop.permute.xlu0 %766
  %769 = vset.pattern.permute.xlu0 8
  %770 = vperm.xlu0 %769, %v34
  %v771 = vpop.permute.xlu0 %770
  %v773 = vadd.f32 %v733, %v743
  %v774 = vadd.f32 %v734, %v747
  %v775 = vadd.f32 %v735, %v751
  %v776 = vadd.f32 %v736, %v755
  %v777 = vadd.f32 %v737, %v759
  %v778 = vadd.f32 %v738, %v763
  %v779 = vadd.f32 %v739, %v767
  %v780 = vadd.f32 %v740, %v771
  %v781 = vmax.f32 %v773, 0.0
  %v782 = vmax.f32 %v774, 0.0
  %v783 = vmax.f32 %v775, 0.0
  %v784 = vmax.f32 %v776, 0.0
  %v785 = vmax.f32 %v777, 0.0
  %v786 = vmax.f32 %v778, 0.0
  %v787 = vmax.f32 %v779, 0.0
  %v788 = vmax.f32 %v780, 0.0
  %v789 = vld [vmem:[%s4] sm:$0xf]
  %v790 = vld [vmem:[%s4 + $0x4] sm:$0xf]
  %v791 = vld [vmem:[%s4 + $0x8] sm:$0xf]
  %v792 = vld [vmem:[%s4 + $0xc] sm:$0xf]
  %v793 = vld [vmem:[%s4 + $0x10] sm:$0xf]
  %v794 = vld [vmem:[%s4 + $0x14] sm:$0xf]
  %v795 = vld [vmem:[%s4 + $0x18] sm:$0xf]
  %v796 = vld [vmem:[%s4 + $0x1c] sm:$0xf]
  %v797 = vpack.c.bf16 %v782, %v781
  %v798 = vpack.c.bf16 %v784, %v783
  %v799 = vpack.c.bf16 %v786, %v785
  %v800 = vpack.c.bf16 %v788, %v787
  %801 = vset.pattern.permute.xlu0 9
  %802 = vperm.xlu0 %801, %v27
  %v803 = vpop.permute.xlu0 %802
  %805 = vset.pattern.permute.xlu0 9
  %806 = vperm.xlu0 %805, %v28
  %v807 = vpop.permute.xlu0 %806
  %809 = vset.pattern.permute.xlu0 9
  %810 = vperm.xlu0 %809, %v29
  %v811 = vpop.permute.xlu0 %810
  %813 = vset.pattern.permute.xlu0 9
  %814 = vperm.xlu0 %813, %v30
  %v815 = vpop.permute.xlu0 %814
  %817 = vset.pattern.permute.xlu0 9
  %818 = vperm.xlu0 %817, %v31
  %v819 = vpop.permute.xlu0 %818
  %821 = vset.pattern.permute.xlu0 9
  %822 = vperm.xlu0 %821, %v32
  %v823 = vpop.permute.xlu0 %822
  %825 = vset.pattern.permute.xlu0 9
  %826 = vperm.xlu0 %825, %v33
  %v827 = vpop.permute.xlu0 %826
  %829 = vset.pattern.permute.xlu0 9
  %830 = vperm.xlu0 %829, %v34
  %v831 = vpop.permute.xlu0 %830
  %v841 = vunpack.c.l.b16 %v789
  %v842 = vunpack.c.l.b16 %v790
  %v843 = vunpack.c.l.b16 %v791
  %v844 = vunpack.c.l.b16 %v792
  %v845 = vunpack.c.l.b16 %v793
  %v846 = vunpack.c.l.b16 %v794
  %v847 = vunpack.c.l.b16 %v795
  %v848 = vunpack.c.l.b16 %v796
  %v849 = vpack.c.b16 %v842, %v841
  %v850 = vpack.c.b16 %v844, %v843
  %v851 = vpack.c.b16 %v846, %v845
  %v852 = vpack.c.b16 %v848, %v847
  %v854 = vsel %vm566, %v849, 0
  %v857 = vsel %vm566, %v850, 0
  %v860 = vsel %vm566, %v851, 0
  %v863 = vsel %vm566, %v852, 0
  %865 = vmatprep.subr.bf16.mxu0 0
  %866 = vmatpush1.bf16.msra.mxu0 %v797
  %867 = vmatprep.subr.bf16.mxu0 0
  %868 = vmatpush1.bf16.msra.mxu0 %v798
  %869 = vmatprep.subr.bf16.mxu0 0
  %870 = vmatpush1.bf16.msra.mxu0 %v799
  %871 = vmatprep.subr.bf16.mxu0 0
  %872 = vmatpush1.bf16.msra.mxu0 %v800
  %873 = vmatprep.subr.bf16.mxu0 0
  %874 = vmatpush1.bf16.msra.mxu0 0
  %875 = vmatprep.subr.bf16.mxu0 0
  %876 = vmatpush1.bf16.msra.mxu0 0
  %877 = vmatprep.subr.bf16.mxu0 0
  %878 = vmatpush1.bf16.msra.mxu0 0
  %879 = vmatprep.subr.bf16.mxu0 0
  %880 = vmatpush1.bf16.msra.mxu0 0
  %881 = vmatprep.subr.bf16.mxu0 0
  %882 = vmatpush1.bf16.msra.mxu0 0
  %883 = vmatprep.subr.bf16.mxu0 0
  %884 = vmatpush1.bf16.msra.mxu0 0
  %885 = vmatprep.subr.bf16.mxu0 0
  %886 = vmatpush1.bf16.msra.mxu0 0
  %887 = vmatprep.subr.bf16.mxu0 0
  %888 = vmatpush1.bf16.msra.mxu0 0
  %889 = vmatprep.subr.bf16.mxu0 0
  %890 = vmatpush1.bf16.msra.mxu0 0
  %891 = vmatprep.subr.bf16.mxu0 0
  %892 = vmatpush1.bf16.msra.mxu0 0
  %893 = vmatprep.subr.bf16.mxu0 0
  %894 = vmatpush1.bf16.msra.mxu0 0
  %895 = vmatprep.subr.bf16.mxu0 0
  %896 = vmatpush1.bf16.msra.mxu0 0
  %897 = vmatprep.mubr.bf16.mxu0 0
  %898 = vmatmul.mubr.bf16.gmra.mrb[0].mxu0 %v854
  %v899 = vpop.f32.mrb[0].mxu0
  %v900 = vadd.f32 %v803, %v899
  %v901 = vpop.f32.mrb[0].mxu0
  %v902 = vpop.f32.mrb[0].mxu0
  %v903 = vadd.f32 %v807, %v902
  %v904 = vpop.f32.mrb[0].mxu0
  %905 = vmatprep.mubr.bf16.mxu0 0
  %906 = vmatmul.mubr.bf16.gmra.mrb[0].mxu0 %v857
  %v907 = vpop.f32.mrb[0].mxu0
  %v908 = vadd.f32 %v811, %v907
  %v909 = vpop.f32.mrb[0].mxu0
  %v910 = vpop.f32.mrb[0].mxu0
  %v911 = vadd.f32 %v815, %v910
  %v912 = vpop.f32.mrb[0].mxu0
  %913 = vmatprep.mubr.bf16.mxu0 0
  %914 = vmatmul.mubr.bf16.gmra.mrb[0].mxu0 %v860
  %v915 = vpop.f32.mrb[0].mxu0
  %v916 = vadd.f32 %v819, %v915
  %v917 = vpop.f32.mrb[0].mxu0
  %v918 = vpop.f32.mrb[0].mxu0
  %v919 = vadd.f32 %v823, %v918
  %v920 = vpop.f32.mrb[0].mxu0
  %921 = vmatprep.mubr.bf16.mxu0 0
  %922 = vmatmul.mubr.bf16.gmra.mrb[0].mxu0 %v863
  %v923 = vpop.f32.mrb[0].mxu0
  %v924 = vadd.f32 %v827, %v923
  %v925 = vpop.f32.mrb[0].mxu0
  %v926 = vpop.f32.mrb[0].mxu0
  %v927 = vadd.f32 %v831, %v926
  %v928 = vpop.f32.mrb[0].mxu0
  %929 = vdwg.mxu0
  %v930 = vadd.f32 %v900, %v903
  %v931 = vadd.f32 %v930, %v908
  %v932 = vadd.f32 %v931, %v911
  %v933 = vadd.f32 %v932, %v916
  %v934 = vadd.f32 %v933, %v919
  %v935 = vadd.f32 %v934, %v924
  %v936 = vadd.f32 %v935, %v927
  %v937 = vrot.slane %v936, 4
  %v938 = vadd.f32 %v936, %v937
  %v939 = vrot.slane %v938, 2
  %v940 = vadd.f32 %v938, %v939
  %v941 = vrot.slane %v940, 1
  %v942 = vadd.f32 %v940, %v941
  %v943 = vmul.f32 %v942, 0.015625
  %v944 = vmul.f32 %v900, %v900
  %v945 = vmul.f32 %v903, %v903
  %v946 = vmul.f32 %v908, %v908
  %v947 = vmul.f32 %v911, %v911
  %v948 = vmul.f32 %v916, %v916
  %v949 = vmul.f32 %v919, %v919
  %v950 = vmul.f32 %v924, %v924
  %v951 = vmul.f32 %v927, %v927
  %v952 = vadd.f32 %v944, %v945
  %v953 = vadd.f32 %v952, %v946
  %v954 = vadd.f32 %v953, %v947
  %v955 = vadd.f32 %v954, %v948
  %v956 = vadd.f32 %v955, %v949
  %v957 = vadd.f32 %v956, %v950
  %v958 = vadd.f32 %v957, %v951
  %v959 = vrot.slane %v958, 4
  %v960 = vadd.f32 %v958, %v959
  %v961 = vrot.slane %v960, 2
  %v962 = vadd.f32 %v960, %v961
  %v963 = vrot.slane %v962, 1
  %v964 = vadd.f32 %v962, %v963
  %v965 = vmul.f32 %v964, 0.015625
  %v966 = vmul.f32 %v943, %v943
  %v967 = vsub.f32 %v965, %v966
  %v968 = vmax.f32 %v967, 0.0
  %v969 = vsub.f32 %v900, %v943
  %v970 = vsub.f32 %v903, %v943
  %v971 = vsub.f32 %v908, %v943
  %v972 = vsub.f32 %v911, %v943
  %v973 = vsub.f32 %v916, %v943
  %v974 = vsub.f32 %v919, %v943
  %v975 = vsub.f32 %v924, %v943
  %v976 = vsub.f32 %v927, %v943
  %v977 = vadd.f32 %v968, 1e-05
  %v978 = vrsqrt.pop %v977
  %v979 = vmul.f32 %v969, %v978
  %v980 = vmul.f32 %v970, %v978
  %v981 = vmul.f32 %v971, %v978
  %v982 = vmul.f32 %v972, %v978
  %v983 = vmul.f32 %v973, %v978
  %v984 = vmul.f32 %v974, %v978
  %v985 = vmul.f32 %v975, %v978
  %v986 = vmul.f32 %v976, %v978
  %987 = vset.pattern.permute.xlu0 10
  %988 = vperm.xlu0 %987, %v27
  %v989 = vpop.permute.xlu0 %988
  %991 = vset.pattern.permute.xlu0 10
  %992 = vperm.xlu0 %991, %v28
  %v993 = vpop.permute.xlu0 %992
  %995 = vset.pattern.permute.xlu0 10
  %996 = vperm.xlu0 %995, %v29
  %v997 = vpop.permute.xlu0 %996
  %999 = vset.pattern.permute.xlu0 10
  %1000 = vperm.xlu0 %999, %v30
  %v1001 = vpop.permute.xlu0 %1000
  %1003 = vset.pattern.permute.xlu0 10
  %1004 = vperm.xlu0 %1003, %v31
  %v1005 = vpop.permute.xlu0 %1004
  %1007 = vset.pattern.permute.xlu0 10
  %1008 = vperm.xlu0 %1007, %v32
  %v1009 = vpop.permute.xlu0 %1008
  %1011 = vset.pattern.permute.xlu0 10
  %1012 = vperm.xlu0 %1011, %v33
  %v1013 = vpop.permute.xlu0 %1012
  %1015 = vset.pattern.permute.xlu0 10
  %1016 = vperm.xlu0 %1015, %v34
  %v1017 = vpop.permute.xlu0 %1016
  %v1019 = vmul.f32 %v979, %v989
  %v1020 = vmul.f32 %v980, %v993
  %v1021 = vmul.f32 %v981, %v997
  %v1022 = vmul.f32 %v982, %v1001
  %v1023 = vmul.f32 %v983, %v1005
  %v1024 = vmul.f32 %v984, %v1009
  %v1025 = vmul.f32 %v985, %v1013
  %v1026 = vmul.f32 %v986, %v1017
  %1027 = vset.pattern.permute.xlu0 11
  %1028 = vperm.xlu0 %1027, %v27
  %v1029 = vpop.permute.xlu0 %1028
  %1031 = vset.pattern.permute.xlu0 11
  %1032 = vperm.xlu0 %1031, %v28
  %v1033 = vpop.permute.xlu0 %1032
  %1035 = vset.pattern.permute.xlu0 11
  %1036 = vperm.xlu0 %1035, %v29
  %v1037 = vpop.permute.xlu0 %1036
  %1039 = vset.pattern.permute.xlu0 11
  %1040 = vperm.xlu0 %1039, %v30
  %v1041 = vpop.permute.xlu0 %1040
  %1043 = vset.pattern.permute.xlu0 11
  %1044 = vperm.xlu0 %1043, %v31
  %v1045 = vpop.permute.xlu0 %1044
  %1047 = vset.pattern.permute.xlu0 11
  %1048 = vperm.xlu0 %1047, %v32
  %v1049 = vpop.permute.xlu0 %1048
  %1051 = vset.pattern.permute.xlu0 11
  %1052 = vperm.xlu0 %1051, %v33
  %v1053 = vpop.permute.xlu0 %1052
  %1055 = vset.pattern.permute.xlu0 11
  %1056 = vperm.xlu0 %1055, %v34
  %v1057 = vpop.permute.xlu0 %1056
  %v1059 = vadd.f32 %v1019, %v1029
  %v1060 = vadd.f32 %v1020, %v1033
  %v1061 = vadd.f32 %v1021, %v1037
  %v1062 = vadd.f32 %v1022, %v1041
  %v1063 = vadd.f32 %v1023, %v1045
  %v1064 = vadd.f32 %v1024, %v1049
  %v1065 = vadd.f32 %v1025, %v1053
  %v1066 = vadd.f32 %v1026, %v1057
  %v1067 = vmax.f32 %v1059, 0.0
  %v1068 = vmax.f32 %v1060, 0.0
  %v1069 = vmax.f32 %v1061, 0.0
  %v1070 = vmax.f32 %v1062, 0.0
  %v1071 = vmax.f32 %v1063, 0.0
  %v1072 = vmax.f32 %v1064, 0.0
  %v1073 = vmax.f32 %v1065, 0.0
  %v1074 = vmax.f32 %v1066, 0.0
  %v1075 = vld [vmem:[%s5] sm:$0x1]
  %v1076 = vpack.c.bf16 %v1068, %v1067
  %v1077 = vpack.c.bf16 %v1070, %v1069
  %v1078 = vpack.c.bf16 %v1072, %v1071
  %v1079 = vpack.c.bf16 %v1074, %v1073
  %1080 = vset.pattern.permute.xlu0 12
  %1081 = vperm.xlu0 %1080, %v27
  %v1082 = vpop.permute.xlu0 %1081
  %v1085 = vsel %vm566, %v1075, 0
  %1087 = vmatprep.subr.bf16.mxu0 0
  %1088 = vmatpush1.bf16.msra.mxu0 %v1076
  %1089 = vmatprep.subr.bf16.mxu0 0
  %1090 = vmatpush1.bf16.msra.mxu0 %v1077
  %1091 = vmatprep.subr.bf16.mxu0 0
  %1092 = vmatpush1.bf16.msra.mxu0 %v1078
  %1093 = vmatprep.subr.bf16.mxu0 0
  %1094 = vmatpush1.bf16.msra.mxu0 %v1079
  %1095 = vmatprep.subr.bf16.mxu0 0
  %1096 = vmatpush1.bf16.msra.mxu0 0
  %1097 = vmatprep.subr.bf16.mxu0 0
  %1098 = vmatpush1.bf16.msra.mxu0 0
  %1099 = vmatprep.subr.bf16.mxu0 0
  %1100 = vmatpush1.bf16.msra.mxu0 0
  %1101 = vmatprep.subr.bf16.mxu0 0
  %1102 = vmatpush1.bf16.msra.mxu0 0
  %1103 = vmatprep.subr.bf16.mxu0 0
  %1104 = vmatpush1.bf16.msra.mxu0 0
  %1105 = vmatprep.subr.bf16.mxu0 0
  %1106 = vmatpush1.bf16.msra.mxu0 0
  %1107 = vmatprep.subr.bf16.mxu0 0
  %1108 = vmatpush1.bf16.msra.mxu0 0
  %1109 = vmatprep.subr.bf16.mxu0 0
  %1110 = vmatpush1.bf16.msra.mxu0 0
  %1111 = vmatprep.subr.bf16.mxu0 0
  %1112 = vmatpush1.bf16.msra.mxu0 0
  %1113 = vmatprep.subr.bf16.mxu0 0
  %1114 = vmatpush1.bf16.msra.mxu0 0
  %1115 = vmatprep.subr.bf16.mxu0 0
  %1116 = vmatpush1.bf16.msra.mxu0 0
  %1117 = vmatprep.subr.bf16.mxu0 0
  %1118 = vmatpush1.bf16.msra.mxu0 0
  %1119 = vmatprep.mubr.bf16.mxu0 0
  %1120 = vmatmul.mubr.bf16.gmra.mrb[0].mxu0 %v1085
  %v1121 = vpop.f32.mrb[0].mxu0
  %v1122 = vadd.f32 %v1082, %v1121
  %v1123 = vpop.f32.mrb[0].mxu0
  %v1124 = vpop.f32.mrb[0].mxu0
  %v1125 = vpop.f32.mrb[0].mxu0
  %1126 = vdwg.mxu0
  %v1127 = vadd.f32 %v1122, 0.0
  %v1128 = vmul.f32 %v1122, %v1122
  %v1129 = vadd.f32 %v1128, 0.0
  %v1130 = vmul.f32 %v1127, %v1127
  %v1131 = vsub.f32 %v1129, %v1130
  %v1132 = vmax.f32 %v1131, 0.0
  %v1133 = vsub.f32 %v1122, %v1127
  %v1134 = vadd.f32 %v1132, 1e-05
  %v1135 = vrsqrt.pop %v1134
  %v1136 = vmul.f32 %v1133, %v1135
  %1137 = vset.pattern.permute.xlu0 13
  %1138 = vperm.xlu0 %1137, %v27
  %v1139 = vpop.permute.xlu0 %1138
  %v1141 = vmul.f32 %v1136, %v1139
  %1142 = vset.pattern.permute.xlu0 14
  %1143 = vperm.xlu0 %1142, %v27
  %v1144 = vpop.permute.xlu0 %1143
  %v1146 = vadd.f32 %v1141, %v1144
  %v1147 = vmax.f32 %v1146, 0.0
  %1148 = vst [vmem:[%s7] sm:$0x1] %v1147
  // Predicated region
  $region30: #{mlp_forward.1} parent=0 // pred_check
    _
  $region31: #{mlp_forward.1} parent=0 // pred_check_branch
    %1150 = sbr.rel (0) target = $region33
  $region32: #{mlp_forward.1} parent=0 // pred_region
    _
  $region33: #{mlp_forward.1} parent=0 // pred_fallthru
    _
  // Predicated region
  $region34: #{mlp_forward.1} parent=0 // pred_check
    _
  $region35: #{mlp_forward.1} parent=0 // pred_check_branch
    %1152 = sbr.rel (0) target = $region37
  $region36: #{mlp_forward.1} parent=0 // pred_region
    _
  $region37: #{mlp_forward.1} parent=0 // pred_fallthru
    _

</llo_original>
